<compile_context>
chip_gen: v5e
topology: v5e:2x2
jax: 0.10.0
libtpu: 0.0.40
codegen_flags: <defaults>
</compile_context>

<pallas_src>
import functools

import jax
import jax.numpy as jnp
from jax.experimental import pallas as pl
from jax.experimental.pallas import tpu as pltpu


def _round_up(x, m):
    return (x + m - 1) // m * m


# ----------------------------------------------------------------------------
# Kernel 1: row-tiled projection  h_tile = x_tile @ W_all  +  hoisted f2 rows
# ----------------------------------------------------------------------------
def _proj_kernel(x_ref, w_ref, a2bd_ref, h_ref, f2_ref):
    h = jnp.dot(x_ref[...], w_ref[...], preferred_element_type=jnp.float32)
    h_bf = h.astype(h_ref.dtype)
    h_ref[...] = h_bf                                                # [tm, H] bf16
    # f2[h, j] = h_j(head h) . a2_h   (block-diag a2, produced directly as rows)
    f2_ref[...] = jax.lax.dot_general(
        a2bd_ref[...], h_bf, dimension_numbers=(((1,), (1,)), ((), ())),
        preferred_element_type=jnp.float32)                          # [8, tm] f32


# ----------------------------------------------------------------------------
# Kernel 2: all attention heads fused + output-layer projection epilogue
# ----------------------------------------------------------------------------
def _attn_heads_kernel(adj_ref, hf_ref, a1t_ref, f2h_ref, wrep_ref, a2o_ref,
                       h2_ref, f2o_ref, *, alpha, nheads, nhid, tm):
    row0 = pl.multiple_of(pl.program_id(0) * tm, tm)
    madj = adj_ref[...] > 0                                          # [tm, Np] neighbor mask
    hf = hf_ref[...]                                                 # [Np, H] bf16 (all nodes)
    ht = hf_ref[pl.ds(row0, tm), :]                                  # [tm, H] this row tile

    # f1[i, h] = h_i(head h) . a1_h  -- block-diagonal a1, one matmul for all heads
    f1 = jnp.dot(ht, a1t_ref[...], preferred_element_type=jnp.float32)   # [tm, nheads]

    outs = []
    for h in range(nheads):
        e = f1[:, h:h + 1] + f2h_ref[h:h + 1, :]                     # [tm, Np]
        e = jnp.maximum(e, alpha * e)                                # LeakyReLU(alpha)
        e = jnp.where(madj, e, -9.0e10)                              # reference masking
        e = e - jnp.max(e, axis=1, keepdims=True)                    # masked row max
        p = jnp.exp(e)                                               # masked entries -> 0
        s = jnp.sum(p, axis=1, keepdims=True)
        hp = jnp.dot(p.astype(jnp.bfloat16), hf[:, h * nhid:(h + 1) * nhid],
                     preferred_element_type=jnp.float32)             # [tm, nhid]
        hp = hp * pl.reciprocal(s, approx=True)                      # deferred softmax norm
        hp = jnp.where(hp > 0, hp, jnp.exp(jnp.minimum(hp, 0.0)) - 1.0)   # ELU (concat=True)
        outs.append(hp)

    # epilogue: head-average folded into the stacked output weight  (z @ W_out)
    hcat = jnp.concatenate(outs, axis=1).astype(jnp.bfloat16)        # [tm, H]
    h2 = jnp.dot(hcat, wrep_ref[...], preferred_element_type=jnp.float32)  # [tm, P]
    h2_bf = h2.astype(h2_ref.dtype)
    h2_ref[...] = h2_bf
    # hoisted output-layer f2 row:  f2o[0, j] = h2_j . a2_out
    f2o_ref[...] = jax.lax.dot_general(
        a2o_ref[...], h2_bf, dimension_numbers=(((1,), (1,)), ((), ())),
        preferred_element_type=jnp.float32)                          # [8, tm] f32


# ----------------------------------------------------------------------------
# Kernel 3: output attention layer (concat=False) + outer ELU + softmax(dim=1)
# ----------------------------------------------------------------------------
def _attn_out_kernel(adj_ref, h2f_ref, a1o_ref, f2o_ref, o_ref, *, alpha, nout, tm):
    row0 = pl.multiple_of(pl.program_id(0) * tm, tm)
    madj = adj_ref[...] > 0                                          # [tm, Np]
    h2 = h2f_ref[...]                                                # [Np, P] bf16
    ht = h2f_ref[pl.ds(row0, tm), :]                                 # [tm, P]

    f1 = jnp.dot(ht, a1o_ref[...], preferred_element_type=jnp.float32)    # [tm, 1]
    e = f1 + f2o_ref[0:1, :]                                         # [tm, Np]
    e = jnp.maximum(e, alpha * e)                                    # LeakyReLU(alpha)
    e = jnp.where(madj, e, -9.0e10)
    e = e - jnp.max(e, axis=1, keepdims=True)
    p = jnp.exp(e)
    s = jnp.sum(p, axis=1, keepdims=True)
    hp = jnp.dot(p.astype(jnp.bfloat16), h2, preferred_element_type=jnp.float32)  # [tm, P]
    hp = hp * pl.reciprocal(s, approx=True)
    y = jnp.where(hp > 0, hp, jnp.exp(jnp.minimum(hp, 0.0)) - 1.0)   # outer F.elu

    # softmax(dim=1) over the real `nout` columns (padded lanes are exactly zero)
    col = jax.lax.broadcasted_iota(jnp.int32, y.shape, 1)
    colmask = (col < nout).astype(jnp.float32)
    y = y - jnp.max(y, axis=1, keepdims=True)
    py = jnp.exp(y) * colmask
    o_ref[...] = py / jnp.sum(py, axis=1, keepdims=True)


# ----------------------------------------------------------------------------
# Parameter packing (host / XLA side, one-time, tiny)
# ----------------------------------------------------------------------------
def _pack_params(Ws, a_heads, w_out, a_out, P):
    nheads, nfeat, nhid = Ws.shape
    H = nheads * nhid
    nout = w_out.shape[1]

    w_all = jnp.concatenate([Ws[h] for h in range(nheads)], axis=1)          # [nfeat, H]

    a1t = jnp.zeros((H, nheads), jnp.float32)                                # block-diag a1^T
    a2bd = jnp.zeros((8, H), jnp.float32)                                    # block-diag a2 (8-row pad)
    for h in range(nheads):
        a1t = a1t.at[h * nhid:(h + 1) * nhid, h].set(a_heads[h, :nhid])
        a2bd = a2bd.at[h, h * nhid:(h + 1) * nhid].set(a_heads[h, nhid:])

    # z @ W_out with z = mean_h(head_h)  ==  [head_0|...|head_{nh-1}] @ (vstack(W_out)/nheads)
    w_rep = jnp.concatenate([w_out] * nheads, axis=0) / nheads               # [H, nout]
    w_rep = jnp.pad(w_rep, ((0, 0), (0, P - nout)))                          # [H, P]
    a1o = jnp.pad(a_out[:nout], (0, P - nout)).reshape(P, 1)                 # [P, 1]
    a2o = jnp.zeros((8, P), jnp.float32).at[0, :nout].set(a_out[nout:])      # [8, P]

    cast = lambda t: t.astype(jnp.bfloat16)
    return cast(w_all), cast(a1t), cast(a2bd), cast(w_rep), cast(a1o), cast(a2o)


# ----------------------------------------------------------------------------
# Wrapper
# ----------------------------------------------------------------------------
def gat_forward(x, adj, Ws, a_heads, w_out, a_out, *, alpha):
    N, nfeat = x.shape
    nheads, _, nhid = Ws.shape
    nout = w_out.shape[1]
    H = nheads * nhid
    P = _round_up(nout, 128)                       # lane-dense padded output width
    assert nheads <= 8, "a2 block-diagonals are sublane-padded to 8 rows"
    # TODO(synk): for nheads > 8, pad the a2 block-diagonal to the next multiple of 8.

    TM = 128                                       # fixed row tile (fits v7x's 64 MiB VMEM)
    Np = _round_up(N, TM)                          # pad N; padded rows masked / sliced off
    grid = (Np // TM,)

    w_all, a1t, a2bd, w_rep, a1o, a2o = _pack_params(Ws, a_heads, w_out, a_out, P)
    x_pad = jnp.pad(x, ((0, Np - N), (0, 0))).astype(jnp.bfloat16)
    adj_bf = jnp.pad((adj > 0).astype(jnp.bfloat16), ((0, Np - N), (0, Np - N)))

    cparams = pltpu.CompilerParams(
        dimension_semantics=("parallel",),         # independent row tiles -> 2-TC friendly
        vmem_limit_bytes=48 * 1024 * 1024)

    def row_spec(d):
        return pl.BlockSpec((TM, d), lambda i: (i, 0))

    def col_spec(r):
        return pl.BlockSpec((r, TM), lambda i: (0, i))

    def inv_spec(shape):
        # grid-invariant block, fetched once; single-buffer it when supported.
        try:
            return pl.BlockSpec(shape, lambda i: (0, 0), pipeline_mode=pl.Buffered(1))
        except Exception:
            return pl.BlockSpec(shape, lambda i: (0, 0))

    # 1) lane-dense projection + hoisted per-head f2 rows
    h_all, f2h = pl.pallas_call(
        _proj_kernel,
        out_shape=(jax.ShapeDtypeStruct((Np, H), jnp.bfloat16),
                   jax.ShapeDtypeStruct((8, Np), jnp.float32)),
        grid_spec=pltpu.PrefetchScalarGridSpec(
            num_scalar_prefetch=0, grid=grid,
            in_specs=[row_spec(nfeat), inv_spec((nfeat, H)), inv_spec((8, H))],
            out_specs=[row_spec(H), col_spec(8)]),
        compiler_params=cparams,
    )(x_pad, w_all, a2bd)

    # 2) fused multi-head attention + output projection epilogue + hoisted out-layer f2
    h2_all, f2o = pl.pallas_call(
        functools.partial(_attn_heads_kernel, alpha=alpha, nheads=nheads,
                          nhid=nhid, tm=TM),
        out_shape=(jax.ShapeDtypeStruct((Np, P), jnp.bfloat16),
                   jax.ShapeDtypeStruct((8, Np), jnp.float32)),
        grid_spec=pltpu.PrefetchScalarGridSpec(
            num_scalar_prefetch=0, grid=grid,
            in_specs=[row_spec(Np),            # adj row slab (streamed per step)
                      inv_spec((Np, H)),       # h for all nodes (grid-invariant)
                      inv_spec((H, nheads)),   # block-diag a1^T
                      inv_spec((8, Np)),       # hoisted f2 rows (per head)
                      inv_spec((H, P)),        # stacked output weight / nheads
                      inv_spec((8, P))],       # output-layer a2 (row 0)
            out_specs=[row_spec(P), col_spec(8)]),
        compiler_params=cparams,
        cost_estimate=pl.CostEstimate(
            flops=2 * Np * Np * H + 2 * Np * H * P,
            transcendentals=nheads * Np * Np,
            bytes_accessed=2 * Np * Np + 8 * Np * H),
    )(adj_bf, h_all, a1t, f2h, w_rep, a2o)

    # 3) output attention + outer ELU + softmax(dim=1) over the real classes
    out_pad = pl.pallas_call(
        functools.partial(_attn_out_kernel, alpha=alpha, nout=nout, tm=TM),
        out_shape=jax.ShapeDtypeStruct((Np, P), jnp.float32),
        grid_spec=pltpu.PrefetchScalarGridSpec(
            num_scalar_prefetch=0, grid=grid,
            in_specs=[row_spec(Np),
                      inv_spec((Np, P)),
                      inv_spec((P, 1)),
                      inv_spec((8, Np))],
            out_specs=row_spec(P)),
        compiler_params=cparams,
        cost_estimate=pl.CostEstimate(
            flops=2 * Np * Np * P,
            transcendentals=Np * Np + Np * P,
            bytes_accessed=2 * Np * Np + 8 * Np * P),
    )(adj_bf, h2_all, a1o, f2o)

    return out_pad[:N, :nout]


# ----------------------------------------------------------------------------
# Pure-JAX f32 reference (mirrors the PyTorch forward, eval mode)
# ----------------------------------------------------------------------------
def _ref_layer(x, adj, w, a1, a2, alpha, concat):
    h = x @ w
    f1 = h @ a1.reshape(-1, 1)
    f2 = h @ a2.reshape(-1, 1)
    e = f1 + f2.T
    e = jnp.where(e > 0, e, alpha * e)
    att = jnp.where(adj > 0, e, jnp.full_like(e, -9.0e10))
    att = jax.nn.softmax(att, axis=1)
    hp = att @ h
    return jax.nn.elu(hp) if concat else hp


def _ref_gat(x, adj, Ws, a_heads, w_out, a_out, alpha):
    nheads, _, nhid = Ws.shape
    nout = w_out.shape[1]
    z = jnp.zeros((x.shape[0], nhid), jnp.float32)
    for h in range(nheads):
        z = z + _ref_layer(x, adj, Ws[h], a_heads[h, :nhid], a_heads[h, nhid:], alpha, True)
    z = z / nheads
    y = jax.nn.elu(_ref_layer(z, adj, w_out, a_out[:nout], a_out[nout:], alpha, False))
    return jax.nn.softmax(y, axis=1)


if __name__ == "__main__":
    # Small shapes consistent with GAT(nfeat, nhid, dropout, alpha, nheads); out dim is 56.
    N, nfeat, nhid, nheads, nout = 8, 16, 32, 4, 56
    alpha = 0.2

    key = jax.random.PRNGKey(0)
    k_x, k_adj, k_w, k_a, k_wo, k_ao = jax.random.split(key, 6)

    x = jax.random.normal(k_x, (N, nfeat), jnp.float32)
    adj = (jax.random.uniform(k_adj, (N, N)) > 0.5).astype(jnp.float32)
    adj = jnp.maximum(adj, jnp.eye(N, dtype=jnp.float32))  # self-loops

    # Deterministic synthetic parameters (module init is zeros; use small randoms
    # so the softmax / attention paths are non-degenerate).
    Ws = 0.1 * jax.random.normal(k_w, (nheads, nfeat, nhid), jnp.float32)
    a_heads = 0.1 * jax.random.normal(k_a, (nheads, 2 * nhid), jnp.float32)
    w_out = 0.1 * jax.random.normal(k_wo, (nhid, nout), jnp.float32)
    a_out = 0.1 * jax.random.normal(k_ao, (2 * nout,), jnp.float32)

    out = gat_forward(x, adj, Ws, a_heads, w_out, a_out, alpha=alpha)
    out = jax.block_until_ready(out)

    ref = _ref_gat(x, adj, Ws, a_heads, w_out, a_out, alpha)
    ref = jax.block_until_ready(ref)

    assert out.shape == (N, nout)
    max_err = float(jnp.max(jnp.abs(out - ref)))
    assert jnp.allclose(out, ref, atol=2e-3, rtol=2e-3), f"mismatch vs reference (max abs err {max_err})"

    print("KERNEL_OK")
</pallas_src>

<mosaic_0001>
module attributes {stable_mosaic.version = 11 : i64} {
  func.func @_proj_kernel(%arg0: i32, %arg1: memref<128x16xbf16, #tpu.memory_space<vmem>>, %arg2: memref<16x128xbf16, #tpu.memory_space<vmem>>, %arg3: memref<8x128xbf16, #tpu.memory_space<vmem>>, %arg4: memref<128x128xbf16, #tpu.memory_space<vmem>>, %arg5: memref<8x128xf32, #tpu.memory_space<vmem>>) attributes {dimension_semantics = [#tpu.dimension_semantics<parallel>], iteration_bounds = array<i64: 1>, scalar_prefetch = 0 : i64, scratch_operands = 0 : i64, tpu.core_type = #tpu.core_type<tc>, window_params = [{transform_indices = @transform_0, window_bounds = array<i64: 128, 16>}, {pipeline_mode = #tpu.pipeline_mode<synchronous>, transform_indices = @transform_1, window_bounds = array<i64: 16, 128>}, {pipeline_mode = #tpu.pipeline_mode<synchronous>, transform_indices = @transform_2, window_bounds = array<i64: 8, 128>}, {transform_indices = @transform_3, window_bounds = array<i64: 128, 128>}, {transform_indices = @transform_4, window_bounds = array<i64: 8, 128>}]} {
    %c0 = arith.constant 0 : index
    %c0_0 = arith.constant 0 : index
    %0 = vector.load %arg1[%c0, %c0_0] : memref<128x16xbf16, #tpu.memory_space<vmem>>, vector<128x16xbf16>
    %c0_1 = arith.constant 0 : index
    %c0_2 = arith.constant 0 : index
    %1 = vector.load %arg2[%c0_1, %c0_2] : memref<16x128xbf16, #tpu.memory_space<vmem>>, vector<16x128xbf16>
    %cst = arith.constant dense<0.000000e+00> : vector<128x128xf32>
    %2 = tpu.matmul %0, %1, %cst {dimension_numbers = #tpu.dot_dimension_numbers<[1], [0], [0], [1], [0, 0, 1, 1], [], []>} : vector<128x16xbf16>, vector<16x128xbf16>, vector<128x128xf32> -> vector<128x128xf32>
    %3 = arith.truncf %2 : vector<128x128xf32> to vector<128x128xbf16>
    %c0_3 = arith.constant 0 : index
    %c0_4 = arith.constant 0 : index
    %4 = vector.load %arg4[%c0_3, %c0_4] : memref<128x128xbf16, #tpu.memory_space<vmem>>, vector<128x128xbf16>
    tpu.vector_store %arg4[%c0_3, %c0_4], %3 {strides = array<i32>} : memref<128x128xbf16, #tpu.memory_space<vmem>>, vector<128x128xbf16>,
    %c0_5 = arith.constant 0 : index
    %c0_6 = arith.constant 0 : index
    %5 = vector.load %arg3[%c0_5, %c0_6] : memref<8x128xbf16, #tpu.memory_space<vmem>>, vector<8x128xbf16>
    %cst_7 = arith.constant dense<0.000000e+00> : vector<8x128xf32>
    %6 = tpu.matmul %5, %3, %cst_7 {dimension_numbers = #tpu.dot_dimension_numbers<[1], [1], [0], [0], [0, 0, 1, 0], [], []>} : vector<8x128xbf16>, vector<128x128xbf16>, vector<8x128xf32> -> vector<8x128xf32>
    %c0_8 = arith.constant 0 : index
    %c0_9 = arith.constant 0 : index
    %7 = vector.load %arg5[%c0_8, %c0_9] : memref<8x128xf32, #tpu.memory_space<vmem>>, vector<8x128xf32>
    tpu.vector_store %arg5[%c0_8, %c0_9], %6 {strides = array<i32>} : memref<8x128xf32, #tpu.memory_space<vmem>>, vector<8x128xf32>,
    return
  }
  func.func @transform_0(%arg0: i32) -> (i32, i32) {
    %c0_i32 = arith.constant 0 : i32
    %c0_i32_0 = arith.constant 0 : i32
    return %arg0, %c0_i32 : i32, i32
  }
  func.func @transform_1(%arg0: i32) -> (i32, i32) {
    %c0_i32 = arith.constant 0 : i32
    %c0_i32_0 = arith.constant 0 : i32
    %c0_i32_1 = arith.constant 0 : i32
    return %c0_i32, %c0_i32_0 : i32, i32
  }
  func.func @transform_2(%arg0: i32) -> (i32, i32) {
    %c0_i32 = arith.constant 0 : i32
    %c0_i32_0 = arith.constant 0 : i32
    %c0_i32_1 = arith.constant 0 : i32
    return %c0_i32, %c0_i32_0 : i32, i32
  }
  func.func @transform_3(%arg0: i32) -> (i32, i32) {
    %c0_i32 = arith.constant 0 : i32
    %c0_i32_0 = arith.constant 0 : i32
    return %arg0, %c0_i32 : i32, i32
  }
  func.func @transform_4(%arg0: i32) -> (i32, i32) {
    %c0_i32 = arith.constant 0 : i32
    %c0_i32_0 = arith.constant 0 : i32
    return %c0_i32, %arg0 : i32, i32
  }
}

</mosaic_0001>

<llo_original>
// kernel: tpu_custom_call.1
$region0: #{tpu_custom_call.1}
  #allocation0 [shape = 'u32[]', space=smem, size = 0x4, offset = 0x4, fixed_abs, tag = 'smem constant byte address 0x4 - core index']
  #allocation1 [shape = 'u32[72,128]{1,0:T(1,128)}', space=vmem, size = 0x9000, scoped, tag = 'internal scratch']
  %s0 = inlined_call_operand.vmem [shape: bf16[128,16], index: 0, kind: input, shape index: {}]
  %s1 = inlined_call_operand.vmem [shape: bf16[16,128], index: 1, kind: input, shape index: {}]
  %s2 = inlined_call_operand.vmem [shape: bf16[8,128], index: 2, kind: input, shape index: {}]
  %s3 = inlined_call_operand.hbm [shape: bf16[128,128], index: 3, kind: output, shape index: {0}]
  %s4 = inlined_call_operand.hbm [shape: f32[8,128], index: 4, kind: output, shape index: {1}]
  %5 = xla_tuple %s3, %s4
  %s6 = sld [smem:[#allocation0]]
  $region30: #{tpu_custom_call.1} parent=0
    _
  %s8 = ssub.s32 1, %s6
  %s9 = scalar_select 0, %s8, %s6
  $region1: #{tpu_custom_call.1} parent=0
    #allocation2 [shape = 'u8[32768]{0}', space=vmem, size = 0x8000, scoped, tag = 'output window, operand 0, single buffered']
    #allocation3 [shape = 's32[1]{0}', space=sflag, size = 0x4, scoped, tag = 'scoped memory for tpu_custom_call.1']
    #allocation4 [shape = 'u8[4096]{0}', space=vmem, size = 0x1000, scoped, tag = 'output window, operand 1, single buffered']
    #allocation5 [shape = 's32[1]{0}', space=sflag, size = 0x4, scoped, tag = 'scoped memory for tpu_custom_call.1']
    %10 = vsyncpa [#allocation3], 0
    %11 = vsyncpa [#allocation5], 0
    // Predicated region
    $region2: #{tpu_custom_call.1} parent=1 // pred_check
      _
    $region3: #{tpu_custom_call.1} parent=1 // pred_check_branch
      %13 = sbr.rel (0) target = $region5
    $region4: #{tpu_custom_call.1} parent=1 // pred_region
      _
    $region5: #{tpu_custom_call.1} parent=1 // pred_fallthru
      _
    // Predicated region
    $region6: #{tpu_custom_call.1} parent=1 // pred_check
      _
    $region7: #{tpu_custom_call.1} parent=1 // pred_check_branch
      %15 = sbr.rel (0) target = $region9
    $region8: #{tpu_custom_call.1} parent=1 // pred_region
      _
    $region9: #{tpu_custom_call.1} parent=1 // pred_fallthru
      _
    // Predicated region
    $region10: #{tpu_custom_call.1} parent=1 // pred_check
      _
    $region11: #{tpu_custom_call.1} parent=1 // pred_check_branch
      %17 = sbr.rel (0) target = $region13
    $region12: #{tpu_custom_call.1} parent=1 // pred_region
      _
    $region13: #{tpu_custom_call.1} parent=1 // pred_fallthru
      _
    %v19 = vld [vmem:[%s0] sm:$0xf]
    %v20 = vld [vmem:[%s0 + $0x4] sm:$0xf]
    %v21 = vld [vmem:[%s0 + $0x8] sm:$0xf]
    %v22 = vld [vmem:[%s0 + $0xc] sm:$0xf]
    %v23 = vld [vmem:[%s0 + $0x10] sm:$0xf]
    %v24 = vld [vmem:[%s0 + $0x14] sm:$0xf]
    %v25 = vld [vmem:[%s0 + $0x18] sm:$0xf]
    %v26 = vld [vmem:[%s0 + $0x1c] sm:$0xf]
    %v27 = vld [vmem:[%s0 + $0x20] sm:$0xf]
    %v28 = vld [vmem:[%s0 + $0x24] sm:$0xf]
    %v29 = vld [vmem:[%s0 + $0x28] sm:$0xf]
    %v30 = vld [vmem:[%s0 + $0x2c] sm:$0xf]
    %v31 = vld [vmem:[%s0 + $0x30] sm:$0xf]
    %v32 = vld [vmem:[%s0 + $0x34] sm:$0xf]
    %v33 = vld [vmem:[%s0 + $0x38] sm:$0xf]
    %v34 = vld [vmem:[%s0 + $0x3c] sm:$0xf]
    %v35 = vld [vmem:[%s1] sm:$0xf]
    %v36 = vld [vmem:[%s1 + $0x4] sm:$0xf]
    %v53 = vunpack.c.l.b16 %v19
    %v54 = vunpack.c.l.b16 %v20
    %v55 = vunpack.c.l.b16 %v21
    %v56 = vunpack.c.l.b16 %v22
    %v57 = vunpack.c.l.b16 %v23
    %v58 = vunpack.c.l.b16 %v24
    %v59 = vunpack.c.l.b16 %v25
    %v60 = vunpack.c.l.b16 %v26
    %v61 = vunpack.c.l.b16 %v27
    %v62 = vunpack.c.l.b16 %v28
    %v63 = vunpack.c.l.b16 %v29
    %v64 = vunpack.c.l.b16 %v30
    %v65 = vunpack.c.l.b16 %v31
    %v66 = vunpack.c.l.b16 %v32
    %v67 = vunpack.c.l.b16 %v33
    %v68 = vunpack.c.l.b16 %v34
    %v69 = vpack.c.b16 %v54, %v53
    %v70 = vpack.c.b16 %v56, %v55
    %v71 = vpack.c.b16 %v58, %v57
    %v72 = vpack.c.b16 %v60, %v59
    %v73 = vpack.c.b16 %v62, %v61
    %v74 = vpack.c.b16 %v64, %v63
    %v75 = vpack.c.b16 %v66, %v65
    %v76 = vpack.c.b16 %v68, %v67
    %v79 = vunpack.c.l.b16 %v35
    %v80 = vunpack.c.l.b16 %v36
    %v81 = vpack.c.b16 %v80, %v79
    %vm83 = vcmask 130048
    %v85 = vsel %vm83, %v69, 0
    %v88 = vsel %vm83, %v70, 0
    %v91 = vsel %vm83, %v71, 0
    %v94 = vsel %vm83, %v72, 0
    %v97 = vsel %vm83, %v73, 0
    %v100 = vsel %vm83, %v74, 0
    %v103 = vsel %vm83, %v75, 0
    %v106 = vsel %vm83, %v76, 0
    %108 = vmatpush.bf16.msra.mxu0 0
    %109 = vmatpush.bf16.msra.mxu0 0
    %110 = vmatpush.bf16.msra.mxu0 0
    %111 = vmatpush.bf16.msra.mxu0 0
    %112 = vmatpush.bf16.msra.mxu0 0
    %113 = vmatpush.bf16.msra.mxu0 0
    %114 = vmatpush.bf16.msra.mxu0 0
    %115 = vmatpush.bf16.msra.mxu0 %v81
    %116 = vmatmul.bf16.gmra.mxu0 %v85
    %v117 = vpop.f32.mrf.mxu0
    %v118 = vadd.f32 0.0, %v117
    %v119 = vpop.f32.mrf.mxu0
    %v120 = vadd.f32 0.0, %v119
    %121 = vmatmul.bf16.gmra.mxu0 %v88
    %v122 = vpop.f32.mrf.mxu0
    %v123 = vadd.f32 0.0, %v122
    %v124 = vpop.f32.mrf.mxu0
    %v125 = vadd.f32 0.0, %v124
    %126 = vmatmul.bf16.gmra.mxu0 %v91
    %v127 = vpop.f32.mrf.mxu0
    %v128 = vadd.f32 0.0, %v127
    %v129 = vpop.f32.mrf.mxu0
    %v130 = vadd.f32 0.0, %v129
    %131 = vmatmul.bf16.gmra.mxu0 %v94
    %v132 = vpop.f32.mrf.mxu0
    %v133 = vadd.f32 0.0, %v132
    %v134 = vpop.f32.mrf.mxu0
    %v135 = vadd.f32 0.0, %v134
    %136 = vmatmul.bf16.gmra.mxu0 %v97
    %v137 = vpop.f32.mrf.mxu0
    %v138 = vadd.f32 0.0, %v137
    %v139 = vpop.f32.mrf.mxu0
    %v140 = vadd.f32 0.0, %v139
    %141 = vmatmul.bf16.gmra.mxu0 %v100
    %v142 = vpop.f32.mrf.mxu0
    %v143 = vadd.f32 0.0, %v142
    %v144 = vpop.f32.mrf.mxu0
    %v145 = vadd.f32 0.0, %v144
    %146 = vmatmul.bf16.gmra.mxu0 %v103
    %v147 = vpop.f32.mrf.mxu0
    %v148 = vadd.f32 0.0, %v147
    %v149 = vpop.f32.mrf.mxu0
    %v150 = vadd.f32 0.0, %v149
    %151 = vmatmul.bf16.gmra.mxu0 %v106
    %v152 = vpop.f32.mrf.mxu0
    %v153 = vadd.f32 0.0, %v152
    %v154 = vpop.f32.mrf.mxu0
    %v155 = vadd.f32 0.0, %v154
    %156 = vdwg.mxu0
    %v157 = vpack.c.bf16 %v118, %v118
    %v158 = vpack.c.bf16 %v120, %v120
    %v159 = vpack.c.bf16 %v123, %v123
    %v160 = vpack.c.bf16 %v125, %v125
    %v161 = vpack.c.bf16 %v128, %v128
    %v162 = vpack.c.bf16 %v130, %v130
    %v163 = vpack.c.bf16 %v133, %v133
    %v164 = vpack.c.bf16 %v135, %v135
    %v165 = vpack.c.bf16 %v138, %v138
    %v166 = vpack.c.bf16 %v140, %v140
    %v167 = vpack.c.bf16 %v143, %v143
    %v168 = vpack.c.bf16 %v145, %v145
    %v169 = vpack.c.bf16 %v148, %v148
    %v170 = vpack.c.bf16 %v150, %v150
    %v171 = vpack.c.bf16 %v153, %v153
    %v172 = vpack.c.bf16 %v155, %v155
    %173 = vst [vmem:[#allocation2] sm:$0xf] %v157
    %174 = vst [vmem:[#allocation2 + $0x4] sm:$0xf] %v158
    %175 = vst [vmem:[#allocation2 + $0x8] sm:$0xf] %v159
    %176 = vst [vmem:[#allocation2 + $0xc] sm:$0xf] %v160
    %177 = vst [vmem:[#allocation2 + $0x10] sm:$0xf] %v161
    %178 = vst [vmem:[#allocation2 + $0x14] sm:$0xf] %v162
    %179 = vst [vmem:[#allocation2 + $0x18] sm:$0xf] %v163
    %180 = vst [vmem:[#allocation2 + $0x1c] sm:$0xf] %v164
    %181 = vst [vmem:[#allocation2 + $0x20] sm:$0xf] %v165
    %182 = vst [vmem:[#allocation2 + $0x24] sm:$0xf] %v166
    %183 = vst [vmem:[#allocation2 + $0x28] sm:$0xf] %v167
    %184 = vst [vmem:[#allocation2 + $0x2c] sm:$0xf] %v168
    %185 = vst [vmem:[#allocation2 + $0x30] sm:$0xf] %v169
    %186 = vst [vmem:[#allocation2 + $0x34] sm:$0xf] %v170
    %187 = vst [vmem:[#allocation2 + $0x38] sm:$0xf] %v171
    %188 = vst [vmem:[#allocation2 + $0x3c] sm:$0xf] %v172
    %v189 = vld [vmem:[%s2] sm:$0xf]
    %v206 = vunpack.c.l.b16 %v157
    %v207 = vunpack.c.l.b16 %v158
    %v208 = vunpack.c.l.b16 %v159
    %v209 = vunpack.c.l.b16 %v160
    %v210 = vunpack.c.l.b16 %v161
    %v211 = vunpack.c.l.b16 %v162
    %v212 = vunpack.c.l.b16 %v163
    %v213 = vunpack.c.l.b16 %v164
    %v214 = vunpack.c.l.b16 %v165
    %v215 = vunpack.c.l.b16 %v166
    %v216 = vunpack.c.l.b16 %v167
    %v217 = vunpack.c.l.b16 %v168
    %v218 = vunpack.c.l.b16 %v169
    %v219 = vunpack.c.l.b16 %v170
    %v220 = vunpack.c.l.b16 %v171
    %v221 = vunpack.c.l.b16 %v172
    %v222 = vpack.c.b16 %v207, %v206
    %v223 = vpack.c.b16 %v209, %v208
    %v224 = vpack.c.b16 %v211, %v210
    %v225 = vpack.c.b16 %v213, %v212
    %v226 = vpack.c.b16 %v215, %v214
    %v227 = vpack.c.b16 %v217, %v216
    %v228 = vpack.c.b16 %v219, %v218
    %v229 = vpack.c.b16 %v221, %v220
    %238 = vmatpush.bf16.xpose.msra.mxu0 %v229
    %239 = vmatpush.bf16.xpose.msra.mxu0 %v228
    %240 = vmatpush.bf16.xpose.msra.mxu0 %v227
    %241 = vmatpush.bf16.xpose.msra.mxu0 %v226
    %242 = vmatpush.bf16.xpose.msra.mxu0 %v225
    %243 = vmatpush.bf16.xpose.msra.mxu0 %v224
    %244 = vmatpush.bf16.xpose.msra.mxu0 %v223
    %245 = vmatpush.bf16.xpose.msra.mxu0 %v222
    %246 = vmatmul.bf16.gmra.mxu0 %v189
    %v247 = vpop.f32.mrf.mxu0
    %v248 = vadd.f32 0.0, %v247
    %v249 = vpop.f32.mrf.mxu0
    %250 = vdwg.mxu0
    %251 = vst [vmem:[#allocation4] sm:$0xff] %v248
    // Predicated region
    $region14: #{tpu_custom_call.1} parent=1 // pred_check
      _
    $region15: #{tpu_custom_call.1} parent=1 // pred_check_branch
      %253 = sbr.rel (0) target = $region17
    $region16: #{tpu_custom_call.1} parent=1 // pred_region
      %255 = vsyncadd [#allocation3], 0
      %s256 = sshll.u32 [#allocation2], 4
      %s257 = int_to_ptr.vmem [resolvable:$true] %s256
      %s258 = sshll.u32 %s3, 4
      %s259 = int_to_ptr.hbm [resolvable:$true] %s258
      %264 = dma.vmem_to_hbm [thread:$0]  %s257, 1024, %s259, [#allocation3], 64, 64, 4
    $region17: #{tpu_custom_call.1} parent=1 // pred_fallthru
      _
    // Predicated region
    $region18: #{tpu_custom_call.1} parent=1 // pred_check
      _
    $region19: #{tpu_custom_call.1} parent=1 // pred_check_branch
      %266 = sbr.rel (0) target = $region21
    $region20: #{tpu_custom_call.1} parent=1 // pred_region
      %268 = vsyncadd [#allocation5], 0
      %s270 = sshll.u32 [#allocation4], 4
      %s271 = int_to_ptr.vmem [resolvable:$true] %s270
      %s272 = sshll.u32 %s4, 4
      %s273 = int_to_ptr.hbm [resolvable:$true] %s272
      %275 = dma.vmem_to_hbm [thread:$0]  %s271, 128, %s273, [#allocation5]
    $region21: #{tpu_custom_call.1} parent=1 // pred_fallthru
      _
    // Predicated region
    $region22: #{tpu_custom_call.1} parent=1 // pred_check
      _
    $region23: #{tpu_custom_call.1} parent=1 // pred_check_branch
      %277 = sbr.rel (0) target = $region25
    $region24: #{tpu_custom_call.1} parent=1 // pred_region
      %279 = dma.done [#allocation3], 1024
    $region25: #{tpu_custom_call.1} parent=1 // pred_fallthru
      _
    // Predicated region
    $region26: #{tpu_custom_call.1} parent=1 // pred_check
      _
    $region27: #{tpu_custom_call.1} parent=1 // pred_check_branch
      %281 = sbr.rel (0) target = $region29
    $region28: #{tpu_custom_call.1} parent=1 // pred_region
      %283 = dma.done [#allocation5], 128
    $region29: #{tpu_custom_call.1} parent=1 // pred_fallthru
      _
    %284 = vsyncpa [#allocation3], 1
    %285 = vsyncpa [#allocation5], 1

</llo_original>
